<compile_context>
chip_gen: v6e
topology: v6e:2x2x1
jax: 0.10.0
libtpu: 0.0.40
codegen_flags: <defaults>
</compile_context>

<pallas_src>
import functools

import jax
import jax.numpy as jnp
import numpy as np
from jax.experimental import pallas as pl
from jax.experimental.pallas import tpu as pltpu  # noqa: F401  (TPU tuning hooks)


# ----------------------------- Pallas kernels ------------------------------ #

def _ens_fused_kernel(x_ref, w1_ref, b1_ref, w2_ref, b2_ref, out_ref):
    """All members at once: out = relu(x @ W1f + b1f) @ W2_blockdiag + b2f."""
    h = jnp.dot(x_ref[...], w1_ref[...], preferred_element_type=jnp.float32)
    h = jnp.maximum(h + b1_ref[...], 0.0)                       # f32 epilogue (B, N*H)
    y = jnp.dot(h.astype(w2_ref.dtype), w2_ref[...],
                preferred_element_type=jnp.float32) + b2_ref[...]
    out_ref[...] = y.astype(out_ref.dtype)                      # lane-dense (B, padded)


def _ens_fused_prob_kernel(x_ref, w1_ref, b1_ref, w2_ref, b2_ref, out_ref, *,
                           num_loc_cols, lane_aligned_split):
    """Probabilistic members: fused trunk + fused [loc | softplus(scale)] heads."""
    h = jnp.dot(x_ref[...], w1_ref[...], preferred_element_type=jnp.float32)
    h = jnp.maximum(h + b1_ref[...], 0.0)                       # (B, N*H), f32
    y = jnp.dot(h.astype(w2_ref.dtype), w2_ref[...],
                preferred_element_type=jnp.float32) + b2_ref[...]
    if lane_aligned_split:
        # 128-lane-aligned halves: softplus only on the scale half (half the
        # EUP work, no iota/select).  Stores stay lane-aligned.
        loc = y[:, :num_loc_cols]
        sc = y[:, num_loc_cols:]
        sp = jnp.maximum(sc, 0.0) + jnp.log1p(jnp.exp(-jnp.abs(sc)))
        out_ref[:, :num_loc_cols] = loc.astype(out_ref.dtype)
        out_ref[:, num_loc_cols:] = sp.astype(out_ref.dtype)
    else:
        # Sub-128 halves (toy sizes): a static lane slice would force vreg
        # repacking, so mask instead.  Padding columns land in the softplus
        # region; they are sliced away in the wrapper.
        sp = jnp.maximum(y, 0.0) + jnp.log1p(jnp.exp(-jnp.abs(y)))
        col = jax.lax.broadcasted_iota(jnp.int32, y.shape, 1)
        out_ref[...] = jnp.where(col >= num_loc_cols, sp, y).astype(out_ref.dtype)


# --------------------------- weight-layout helpers -------------------------- #
# Run ONCE at init (make_fused_params); never per forward call.

def _fuse_layer1(w1, b1):
    """(N, D_in, H), (N, H) -> (D_in, N*H), (1, N*H) with member-major columns."""
    n, d_in, h = w1.shape
    return jnp.transpose(w1, (1, 0, 2)).reshape(d_in, n * h), b1.reshape(1, n * h)


def _block_diag(w):
    """(N, H, D) -> block-diagonal (N*H, N*D)."""
    n, h, d = w.shape
    eye = jnp.eye(n, dtype=w.dtype)
    return (w[:, :, None, :] * eye[:, None, :, None]).reshape(n * h, n * d)


def _unstack_members(y2d, n, b, d_out):
    """(B, N*D_out) member-major columns -> (N*B, D_out) == torch.cat(preds, 0)."""
    return y2d.reshape(b, n, d_out).transpose(1, 0, 2).reshape(n * b, d_out)


def make_fused_params(params, probabilistic, compute_dtype=jnp.bfloat16):
    """Precompute fused/padded weight layouts once (hoisted out of forward).

    MXU operands (W1f, W2f, and x at call time) are stored in `compute_dtype`
    (bf16 recommended); biases stay f32 since they feed the f32 epilogue.
    Head columns are zero-padded to a multiple of 128 for lane-dense stores.
    """
    w1 = params["w1"]
    n_est, _, _ = w1.shape
    w1f, b1f = _fuse_layer1(w1, params["b1"])

    if not probabilistic:
        d_out = params["w2"].shape[-1]
        w2f = _block_diag(params["w2"])                          # (N*H, N*D_out)
        b2f = params["b2"].reshape(1, n_est * d_out)
        valid_cols = n_est * d_out
    else:
        d_out = params["w_loc"].shape[-1]
        # Columns: [ block-diag(W_loc) | block-diag(W_scale) ]
        w2f = jnp.concatenate([_block_diag(params["w_loc"]),
                               _block_diag(params["w_scale"])], axis=1)
        b2f = jnp.concatenate([params["b_loc"].reshape(1, n_est * d_out),
                               params["b_scale"].reshape(1, n_est * d_out)], axis=1)
        valid_cols = 2 * n_est * d_out

    padded_cols = max(128, pl.cdiv(valid_cols, 128) * 128)       # lane-dense output
    if padded_cols != valid_cols:
        w2f = jnp.pad(w2f, ((0, 0), (0, padded_cols - valid_cols)))
        b2f = jnp.pad(b2f, ((0, 0), (0, padded_cols - valid_cols)))

    return {
        "w1f": w1f.astype(compute_dtype),
        "b1f": b1f.astype(jnp.float32),
        "w2f": w2f.astype(compute_dtype),
        "b2f": b2f.astype(jnp.float32),
    }


# ------------------------------ JAX wrapper --------------------------------- #

@functools.partial(jax.jit,
                   static_argnames=("probabilistic", "n_est", "d_out",
                                    "flatten_output"))
def reg_deep_ensembles_forward(x, fused, *, probabilistic, n_est, d_out,
                               flatten_output=True):
    """Pallas implementation of _RegDeepEnsembles.forward.

    Non-probabilistic: (N*B, D_out) = torch.cat([m(x) for m in models], 0)
    Probabilistic:     {"loc": (N*B, D_out), "scale": (N*B, D_out)}
    flatten_output=False returns transpose-free (B, N, D_out) layouts instead.
    """
    b, d_in = x.shape
    w1f, b1f, w2f, b2f = fused["w1f"], fused["b1f"], fused["w2f"], fused["b2f"]
    h_total = w1f.shape[1]                                       # N*H
    h_per = h_total // n_est
    padded_cols = w2f.shape[1]
    out_dtype = x.dtype
    xc = x.astype(w1f.dtype)                                     # bf16 on MXU

    # FLOPs: trunk + ONLY the nonzero member blocks of the block-diag matmul.
    head_cols_per_member = (2 if probabilistic else 1) * d_out
    flops = (2 * b * d_in * h_total
             + 2 * b * n_est * h_per * head_cols_per_member)
    bytes_acc = sum(int(a.size) * a.dtype.itemsize
                    for a in (xc, w1f, b1f, w2f, b2f))
    bytes_acc += b * padded_cols * jnp.dtype(out_dtype).itemsize

    if not probabilistic:
        y = pl.pallas_call(
            _ens_fused_kernel,
            out_shape=jax.ShapeDtypeStruct((b, padded_cols), out_dtype),
            cost_estimate=pl.CostEstimate(flops=flops, transcendentals=0,
                                          bytes_accessed=bytes_acc),
        )(xc, w1f, b1f, w2f, b2f)
        y = y[:, :n_est * d_out]
        if flatten_output:
            return _unstack_members(y, n_est, b, d_out)
        return y.reshape(b, n_est, d_out)

    num_loc_cols = n_est * d_out
    lane_aligned = (num_loc_cols % 128 == 0)
    transc = 2 * b * ((padded_cols - num_loc_cols) if lane_aligned else padded_cols)
    y = pl.pallas_call(
        functools.partial(_ens_fused_prob_kernel,
                          num_loc_cols=num_loc_cols,
                          lane_aligned_split=lane_aligned),
        out_shape=jax.ShapeDtypeStruct((b, padded_cols), out_dtype),
        cost_estimate=pl.CostEstimate(flops=flops, transcendentals=transc,
                                      bytes_accessed=bytes_acc),
    )(xc, w1f, b1f, w2f, b2f)
    loc = y[:, :num_loc_cols]
    scale = y[:, num_loc_cols:2 * num_loc_cols]
    if flatten_output:
        loc = _unstack_members(loc, n_est, b, d_out)
        scale = _unstack_members(scale, n_est, b, d_out)
    else:
        loc = loc.reshape(b, n_est, d_out)
        scale = scale.reshape(b, n_est, d_out)
    return {"loc": loc, "scale": scale}


# TODO(synk): `store_on_cpu=True` (shuttling member weights host<->device per
# forward) has no in-kernel equivalent; weights stay resident on device here.


# --------------------------- reference (pure JAX) --------------------------- #

def _reference_forward(x, params, probabilistic):
    def member(n):
        hid = jnp.maximum(x @ params["w1"][n] + params["b1"][n], 0.0)
        if not probabilistic:
            return hid @ params["w2"][n] + params["b2"][n]
        loc = hid @ params["w_loc"][n] + params["b_loc"][n]
        scale = jax.nn.softplus(hid @ params["w_scale"][n] + params["b_scale"][n])
        return {"loc": loc, "scale": scale}

    outs = [member(n) for n in range(params["w1"].shape[0])]
    if not probabilistic:
        return jnp.concatenate(outs, axis=0)
    return {k: jnp.concatenate([o[k] for o in outs], axis=0) for k in ("loc", "scale")}


# ----------------------------------- main ----------------------------------- #

if __name__ == "__main__":
    N_EST, B, D_IN, H, D_OUT = 4, 8, 32, 64, 16

    key = jax.random.PRNGKey(0)
    kx, k1, k2, k3, k4, k5, k6, k7, k8 = jax.random.split(key, 9)

    x = jax.random.normal(kx, (B, D_IN), dtype=jnp.float32)

    params = {
        "w1":      0.1 * jax.random.normal(k1, (N_EST, D_IN, H), jnp.float32),
        "b1":      0.1 * jax.random.normal(k2, (N_EST, H), jnp.float32),
        "w2":      0.1 * jax.random.normal(k3, (N_EST, H, D_OUT), jnp.float32),
        "b2":      0.1 * jax.random.normal(k4, (N_EST, D_OUT), jnp.float32),
        "w_loc":   0.1 * jax.random.normal(k5, (N_EST, H, D_OUT), jnp.float32),
        "b_loc":   0.1 * jax.random.normal(k6, (N_EST, D_OUT), jnp.float32),
        "w_scale": 0.1 * jax.random.normal(k7, (N_EST, H, D_OUT), jnp.float32),
        "b_scale": 0.1 * jax.random.normal(k8, (N_EST, D_OUT), jnp.float32),
    }

    ref = _reference_forward(x, params, probabilistic=False)
    ref_p = _reference_forward(x, params, probabilistic=True)

    # --- f32 compute path: strict check against the per-member reference. --- #
    fused_f32 = jax.block_until_ready(
        make_fused_params(params, probabilistic=False, compute_dtype=jnp.float32))
    out = reg_deep_ensembles_forward(x, fused_f32, probabilistic=False,
                                     n_est=N_EST, d_out=D_OUT)
    out = jax.block_until_ready(out)
    assert out.shape == (N_EST * B, D_OUT)
    np.testing.assert_allclose(np.asarray(out), np.asarray(ref),
                               rtol=1e-5, atol=1e-5)

    fused_p_f32 = jax.block_until_ready(
        make_fused_params(params, probabilistic=True, compute_dtype=jnp.float32))
    out_p = reg_deep_ensembles_forward(x, fused_p_f32, probabilistic=True,
                                       n_est=N_EST, d_out=D_OUT)
    out_p = jax.block_until_ready(out_p)
    for k in ("loc", "scale"):
        assert out_p[k].shape == (N_EST * B, D_OUT)
        np.testing.assert_allclose(np.asarray(out_p[k]), np.asarray(ref_p[k]),
                                   rtol=1e-5, atol=1e-5)

    # --- bf16 MXU path (production default): looser tolerance vs f32 ref. --- #
    fused_bf16 = jax.block_until_ready(
        make_fused_params(params, probabilistic=False, compute_dtype=jnp.bfloat16))
    out_bf = reg_deep_ensembles_forward(x, fused_bf16, probabilistic=False,
                                        n_est=N_EST, d_out=D_OUT)
    out_bf = jax.block_until_ready(out_bf)
    assert out_bf.shape == (N_EST * B, D_OUT)
    np.testing.assert_allclose(np.asarray(out_bf), np.asarray(ref),
                               rtol=3e-2, atol=3e-2)

    fused_p_bf16 = jax.block_until_ready(
        make_fused_params(params, probabilistic=True, compute_dtype=jnp.bfloat16))
    out_p_bf = reg_deep_ensembles_forward(x, fused_p_bf16, probabilistic=True,
                                          n_est=N_EST, d_out=D_OUT)
    out_p_bf = jax.block_until_ready(out_p_bf)
    for k in ("loc", "scale"):
        assert out_p_bf[k].shape == (N_EST * B, D_OUT)
        np.testing.assert_allclose(np.asarray(out_p_bf[k]), np.asarray(ref_p[k]),
                                   rtol=3e-2, atol=3e-2)

    print("KERNEL_OK")
</pallas_src>

<mosaic_0001>
module attributes {stable_mosaic.version = 11 : i64} {
  func.func @_ens_fused_kernel(%arg0: memref<8x32xf32, #tpu.memory_space<vmem>>, %arg1: memref<32x256xf32, #tpu.memory_space<vmem>>, %arg2: memref<1x256xf32, #tpu.memory_space<vmem>>, %arg3: memref<256x128xf32, #tpu.memory_space<vmem>>, %arg4: memref<1x128xf32, #tpu.memory_space<vmem>>, %arg5: memref<8x128xf32, #tpu.memory_space<vmem>>) attributes {dimension_semantics = [], scalar_prefetch = 0 : i64, scratch_operands = 0 : i64, tpu.core_type = #tpu.core_type<tc>} {
    %c0 = arith.constant 0 : index
    %c0_0 = arith.constant 0 : index
    %0 = vector.load %arg0[%c0, %c0_0] : memref<8x32xf32, #tpu.memory_space<vmem>>, vector<8x32xf32>
    %c0_1 = arith.constant 0 : index
    %c0_2 = arith.constant 0 : index
    %1 = vector.load %arg1[%c0_1, %c0_2] : memref<32x256xf32, #tpu.memory_space<vmem>>, vector<32x256xf32>
    %cst = arith.constant dense<0.000000e+00> : vector<8x256xf32>
    %2 = tpu.matmul %0, %1, %cst {dimension_numbers = #tpu.dot_dimension_numbers<[1], [0], [0], [1], [0, 0, 1, 1], [], []>} : vector<8x32xf32>, vector<32x256xf32>, vector<8x256xf32> -> vector<8x256xf32>
    %c0_3 = arith.constant 0 : index
    %c0_4 = arith.constant 0 : index
    %3 = vector.load %arg2[%c0_3, %c0_4] : memref<1x256xf32, #tpu.memory_space<vmem>>, vector<1x256xf32>
    %4 = vector.broadcast %3 : vector<1x256xf32> to vector<8x256xf32>
    %5 = arith.addf %2, %4 : vector<8x256xf32>
    %cst_5 = arith.constant 0.000000e+00 : f32
    %6 = vector.broadcast %cst_5 : f32 to vector<8x256xf32>
    %7 = arith.maximumf %5, %6 : vector<8x256xf32>
    %c0_6 = arith.constant 0 : index
    %c0_7 = arith.constant 0 : index
    %8 = vector.load %arg3[%c0_6, %c0_7] : memref<256x128xf32, #tpu.memory_space<vmem>>, vector<256x128xf32>
    %cst_8 = arith.constant dense<0.000000e+00> : vector<8x128xf32>
    %9 = tpu.matmul %7, %8, %cst_8 {dimension_numbers = #tpu.dot_dimension_numbers<[1], [0], [0], [1], [0, 0, 1, 1], [], []>} : vector<8x256xf32>, vector<256x128xf32>, vector<8x128xf32> -> vector<8x128xf32>
    %c0_9 = arith.constant 0 : index
    %c0_10 = arith.constant 0 : index
    %10 = vector.load %arg4[%c0_9, %c0_10] : memref<1x128xf32, #tpu.memory_space<vmem>>, vector<1x128xf32>
    %11 = vector.broadcast %10 : vector<1x128xf32> to vector<8x128xf32>
    %12 = arith.addf %9, %11 : vector<8x128xf32>
    %c0_11 = arith.constant 0 : index
    %c0_12 = arith.constant 0 : index
    %13 = vector.load %arg5[%c0_11, %c0_12] : memref<8x128xf32, #tpu.memory_space<vmem>>, vector<8x128xf32>
    tpu.vector_store %arg5[%c0_11, %c0_12], %12 {strides = array<i32>} : memref<8x128xf32, #tpu.memory_space<vmem>>, vector<8x128xf32>,
    return
  }
}

</mosaic_0001>

<llo_original>
// kernel: reg_deep_ensembles_forward.1
$region0: #{reg_deep_ensembles_forward.1}
  #allocation0 [shape = 'u32[]', space=smem, size = 0x4, offset = 0x4, fixed_abs, tag = 'smem constant byte address 0x4 - core index']
  #allocation1 [shape = 'u32[144,128]{1,0:T(1,128)}', space=vmem, size = 0x12000, scoped, tag = 'internal scratch']
  %s0 = inlined_call_operand.hbm [shape: f32[8,32], index: 0, kind: input, shape index: {}]
  %s1 = inlined_call_operand.hbm [shape: f32[32,256], index: 1, kind: input, shape index: {}]
  %s2 = inlined_call_operand.hbm [shape: f32[1,256], index: 2, kind: input, shape index: {}]
  %s3 = inlined_call_operand.hbm [shape: f32[256,128], index: 3, kind: input, shape index: {}]
  %s4 = inlined_call_operand.vmem [shape: f32[1,128], index: 4, kind: input, shape index: {}]
  %s5 = inlined_call_operand.vmem [shape: f32[8,128], index: 5, kind: output, shape index: {}]
  %s6 = sld [smem:[#allocation0]]
  $region46: #{reg_deep_ensembles_forward.1} parent=0
    _
  %s8 = ssub.s32 1, %s6
  %s9 = scalar_select 0, %s8, %s6
  $region1: #{reg_deep_ensembles_forward.1} parent=0
    #allocation2 [shape = 'u8[4096]{0}', space=vmem, size = 0x1000, scoped, tag = 'input window, operand 0, single buffered']
    #allocation3 [shape = 's32[1]{0}', space=sflag, size = 0x4, scoped, tag = 'scoped memory for reg_deep_ensembles_forward.1']
    #allocation4 [shape = 'u8[32768]{0}', space=vmem, size = 0x8000, scoped, tag = 'input window, operand 1, single buffered']
    #allocation5 [shape = 's32[1]{0}', space=sflag, size = 0x4, scoped, tag = 'scoped memory for reg_deep_ensembles_forward.1']
    #allocation6 [shape = 'u8[1024]{0}', space=vmem, size = 0x400, scoped, tag = 'input window, operand 2, single buffered']
    #allocation7 [shape = 'u8[131072]{0}', space=vmem, size = 0x20000, scoped, tag = 'input window, operand 3, single buffered']
    #allocation8 [shape = 's32[1]{0}', space=sflag, size = 0x4, scoped, tag = 'scoped memory for reg_deep_ensembles_forward.1']
    %10 = vsyncpa [#allocation3], 0
    %11 = vsyncpa [#allocation5], 0
    %12 = vsyncpa [#allocation8], 0
    // Predicated region
    $region2: #{reg_deep_ensembles_forward.1} parent=1 // pred_check
      _
    $region3: #{reg_deep_ensembles_forward.1} parent=1 // pred_check_branch
      %14 = sbr.rel (0) target = $region5
    $region4: #{reg_deep_ensembles_forward.1} parent=1 // pred_region
      %s16 = ssub.s32 128, 128
      %17 = vsyncadd [#allocation3], %s16
      %s19 = sshll.u32 [#allocation2], 4
      %s20 = int_to_ptr.vmem [resolvable:$true] %s19
      %22 = dma.hbm_to_vmem [thread:$0]  %s0, 128, %s20, [#allocation3]
    $region5: #{reg_deep_ensembles_forward.1} parent=1 // pred_fallthru
      _
    // Predicated region
    $region6: #{reg_deep_ensembles_forward.1} parent=1 // pred_check
      _
    $region7: #{reg_deep_ensembles_forward.1} parent=1 // pred_check_branch
      %24 = sbr.rel (0) target = $region9
    $region8: #{reg_deep_ensembles_forward.1} parent=1 // pred_region
      %s26 = ssub.s32 1024, 1024
      %27 = vsyncadd [#allocation5], %s26
      %s28 = sshll.u32 [#allocation4], 4
      %s29 = int_to_ptr.vmem [resolvable:$true] %s28
      %34 = dma.hbm_to_vmem [thread:$0]  %s1, 1024, %s29, [#allocation5], 256, 256, 16
    $region9: #{reg_deep_ensembles_forward.1} parent=1 // pred_fallthru
      _
    // Predicated region
    $region10: #{reg_deep_ensembles_forward.1} parent=1 // pred_check
      _
    $region11: #{reg_deep_ensembles_forward.1} parent=1 // pred_check_branch
      %36 = sbr.rel (0) target = $region13
    $region12: #{reg_deep_ensembles_forward.1} parent=1 // pred_region
      %s38 = ssub.s32 32, 32
      %39 = vsyncadd [#allocation5], %s38
      %s41 = sshll.u32 [#allocation6], 4
      %s42 = int_to_ptr.vmem [resolvable:$true] %s41
      %44 = dma.hbm_to_vmem [thread:$0]  %s2, 32, %s42, [#allocation5]
    $region13: #{reg_deep_ensembles_forward.1} parent=1 // pred_fallthru
      _
    // Predicated region
    $region14: #{reg_deep_ensembles_forward.1} parent=1 // pred_check
      _
    $region15: #{reg_deep_ensembles_forward.1} parent=1 // pred_check_branch
      %46 = sbr.rel (0) target = $region17
    $region16: #{reg_deep_ensembles_forward.1} parent=1 // pred_region
      %s48 = ssub.s32 4096, 4096
      %49 = vsyncadd [#allocation8], %s48
      %s50 = sshll.u32 [#allocation7], 4
      %s51 = int_to_ptr.vmem [resolvable:$true] %s50
      %56 = dma.hbm_to_vmem [thread:$0]  %s3, 4096, %s51, [#allocation8], 128, 128, 8
    $region17: #{reg_deep_ensembles_forward.1} parent=1 // pred_fallthru
      _
    // Predicated region
    $region18: #{reg_deep_ensembles_forward.1} parent=1 // pred_check
      _
    $region19: #{reg_deep_ensembles_forward.1} parent=1 // pred_check_branch
      %58 = sbr.rel (0) target = $region21
    $region20: #{reg_deep_ensembles_forward.1} parent=1 // pred_region
      _
    $region21: #{reg_deep_ensembles_forward.1} parent=1 // pred_fallthru
      _
    // Predicated region
    $region22: #{reg_deep_ensembles_forward.1} parent=1 // pred_check
      _
    $region23: #{reg_deep_ensembles_forward.1} parent=1 // pred_check_branch
      %60 = sbr.rel (0) target = $region25
    $region24: #{reg_deep_ensembles_forward.1} parent=1 // pred_region
      %61 = dma.done [#allocation3], 128
    $region25: #{reg_deep_ensembles_forward.1} parent=1 // pred_fallthru
      _
    // Predicated region
    $region26: #{reg_deep_ensembles_forward.1} parent=1 // pred_check
      _
    $region27: #{reg_deep_ensembles_forward.1} parent=1 // pred_check_branch
      %63 = sbr.rel (0) target = $region29
    $region28: #{reg_deep_ensembles_forward.1} parent=1 // pred_region
      %64 = dma.done [#allocation5], 1024
    $region29: #{reg_deep_ensembles_forward.1} parent=1 // pred_fallthru
      _
    // Predicated region
    $region30: #{reg_deep_ensembles_forward.1} parent=1 // pred_check
      _
    $region31: #{reg_deep_ensembles_forward.1} parent=1 // pred_check_branch
      %66 = sbr.rel (0) target = $region33
    $region32: #{reg_deep_ensembles_forward.1} parent=1 // pred_region
      %67 = dma.done [#allocation5], 32
    $region33: #{reg_deep_ensembles_forward.1} parent=1 // pred_fallthru
      _
    // Predicated region
    $region34: #{reg_deep_ensembles_forward.1} parent=1 // pred_check
      _
    $region35: #{reg_deep_ensembles_forward.1} parent=1 // pred_check_branch
      %69 = sbr.rel (0) target = $region37
    $region36: #{reg_deep_ensembles_forward.1} parent=1 // pred_region
      %70 = dma.done [#allocation8], 4096
    $region37: #{reg_deep_ensembles_forward.1} parent=1 // pred_fallthru
      _
    %v71 = vld [vmem:[#allocation2] sm:$0xff]
    %v72 = vld [vmem:[#allocation4] sm:$0xff]
    %v73 = vld [vmem:[#allocation4 + $0x8] sm:$0xff]
    %v74 = vld [vmem:[#allocation4 + $0x10] sm:$0xff]
    %v75 = vld [vmem:[#allocation4 + $0x18] sm:$0xff]
    %v76 = vld [vmem:[#allocation4 + $0x20] sm:$0xff]
    %v77 = vld [vmem:[#allocation4 + $0x28] sm:$0xff]
    %v78 = vld [vmem:[#allocation4 + $0x30] sm:$0xff]
    %v79 = vld [vmem:[#allocation4 + $0x38] sm:$0xff]
    %v80 = vld [vmem:[#allocation6] sm:$0x3]
    %v82 = vlaneseq
    %v83 = vshrl.u32 %v82, 7
    %v84 = vsub.s32 0, %v83
    %v85 = vrot.slane %v80, %v84
    %v86 = vlaneseq
    %v87 = vshrl.u32 %v86, 7
    %v88 = vsub.s32 1, %v87
    %v89 = vrot.slane %v80, %v88
    %vm92 = vcmask 261120
    %v94 = vsel %vm92, %v71, 0
    %96 = vmatprep.subr.mxu0 0.0
    %97 = vmatpush1.msra.mxu0 0.0
    %98 = vmatprep.subr.mxu0 0.0
    %99 = vmatpush1.msra.mxu0 0.0
    %100 = vmatprep.subr.mxu0 0.0
    %101 = vmatpush1.msra.mxu0 0.0
    %102 = vmatprep.subr.mxu0 0.0
    %103 = vmatpush1.msra.mxu0 0.0
    %104 = vmatprep.subr.mxu0 0.0
    %105 = vmatpush1.msra.mxu0 0.0
    %106 = vmatprep.subr.mxu0 0.0
    %107 = vmatpush1.msra.mxu0 0.0
    %108 = vmatprep.subr.mxu0 0.0
    %109 = vmatpush1.msra.mxu0 0.0
    %110 = vmatprep.subr.mxu0 0.0
    %111 = vmatpush1.msra.mxu0 0.0
    %112 = vmatprep.subr.mxu0 0.0
    %113 = vmatpush1.msra.mxu0 0.0
    %114 = vmatprep.subr.mxu0 0.0
    %115 = vmatpush1.msra.mxu0 0.0
    %116 = vmatprep.subr.mxu0 0.0
    %117 = vmatpush1.msra.mxu0 0.0
    %118 = vmatprep.subr.mxu0 0.0
    %119 = vmatpush1.msra.mxu0 0.0
    %120 = vmatprep.subr.mxu0 %v79
    %121 = vmatpush1.msra.mxu0 %v78
    %122 = vmatprep.subr.mxu0 %v77
    %123 = vmatpush1.msra.mxu0 %v76
    %124 = vmatprep.subr.mxu0 %v75
    %125 = vmatpush1.msra.mxu0 %v74
    %126 = vmatprep.subr.mxu0 %v73
    %127 = vmatpush1.msra.mxu0 %v72
    %128 = vmatprep.subr.mxu0 0.0
    %129 = vmatpush2.msra.mxu0 0.0
    %130 = vmatprep.subr.mxu0 0.0
    %131 = vmatpush2.msra.mxu0 0.0
    %132 = vmatprep.subr.mxu0 0.0
    %133 = vmatpush2.msra.mxu0 0.0
    %134 = vmatprep.subr.mxu0 0.0
    %135 = vmatpush2.msra.mxu0 0.0
    %136 = vmatprep.subr.mxu0 0.0
    %137 = vmatpush2.msra.mxu0 0.0
    %138 = vmatprep.subr.mxu0 0.0
    %139 = vmatpush2.msra.mxu0 0.0
    %140 = vmatprep.subr.mxu0 0.0
    %141 = vmatpush2.msra.mxu0 0.0
    %142 = vmatprep.subr.mxu0 0.0
    %143 = vmatpush2.msra.mxu0 0.0
    %144 = vmatprep.subr.mxu0 0.0
    %145 = vmatpush2.msra.mxu0 0.0
    %146 = vmatprep.subr.mxu0 0.0
    %147 = vmatpush2.msra.mxu0 0.0
    %148 = vmatprep.subr.mxu0 0.0
    %149 = vmatpush2.msra.mxu0 0.0
    %150 = vmatprep.subr.mxu0 0.0
    %151 = vmatpush2.msra.mxu0 0.0
    %152 = vmatprep.subr.mxu0 0.0
    %153 = vmatpush2.msra.mxu0 0.0
    %154 = vmatprep.subr.mxu0 0.0
    %155 = vmatpush2.msra.mxu0 0.0
    %156 = vmatprep.subr.mxu0 0.0
    %157 = vmatpush2.msra.mxu0 0.0
    %158 = vmatprep.subr.mxu0 0.0
    %159 = vmatpush2.msra.mxu0 0.0
    %160 = vmatprep.mubr.f32.mxu0 0.0
    %161 = vmatmul.mubr.f32.gmra.mxu0 %v94
    %v162 = vpop.f32.mrf.mxu0
    %v163 = vadd.f32 %v85, %v162
    %v164 = vpop.f32.mrf.mxu0
    %v165 = vadd.f32 %v89, %v164
    %166 = vdwg.mxu0
    %v167 = vmax.f32 %v163, 0.0
    %v168 = vmax.f32 %v165, 0.0
    %v169 = vld [vmem:[#allocation7] sm:$0xff]
    %v170 = vld [vmem:[#allocation7 + $0x8] sm:$0xff]
    %v171 = vld [vmem:[#allocation7 + $0x10] sm:$0xff]
    %v172 = vld [vmem:[#allocation7 + $0x18] sm:$0xff]
    %v173 = vld [vmem:[#allocation7 + $0x20] sm:$0xff]
    %v174 = vld [vmem:[#allocation7 + $0x28] sm:$0xff]
    %v175 = vld [vmem:[#allocation7 + $0x30] sm:$0xff]
    %v176 = vld [vmem:[#allocation7 + $0x38] sm:$0xff]
    %v177 = vld [vmem:[#allocation7 + $0x40] sm:$0xff]
    %v178 = vld [vmem:[#allocation7 + $0x48] sm:$0xff]
    %v179 = vld [vmem:[#allocation7 + $0x50] sm:$0xff]
    %v180 = vld [vmem:[#allocation7 + $0x58] sm:$0xff]
    %v181 = vld [vmem:[#allocation7 + $0x60] sm:$0xff]
    %v182 = vld [vmem:[#allocation7 + $0x68] sm:$0xff]
    %v183 = vld [vmem:[#allocation7 + $0x70] sm:$0xff]
    %v184 = vld [vmem:[#allocation7 + $0x78] sm:$0xff]
    %v185 = vld [vmem:[#allocation7 + $0x80] sm:$0xff]
    %v186 = vld [vmem:[#allocation7 + $0x88] sm:$0xff]
    %v187 = vld [vmem:[#allocation7 + $0x90] sm:$0xff]
    %v188 = vld [vmem:[#allocation7 + $0x98] sm:$0xff]
    %v189 = vld [vmem:[#allocation7 + $0xa0] sm:$0xff]
    %v190 = vld [vmem:[#allocation7 + $0xa8] sm:$0xff]
    %v191 = vld [vmem:[#allocation7 + $0xb0] sm:$0xff]
    %v192 = vld [vmem:[#allocation7 + $0xb8] sm:$0xff]
    %v193 = vld [vmem:[#allocation7 + $0xc0] sm:$0xff]
    %v194 = vld [vmem:[#allocation7 + $0xc8] sm:$0xff]
    %v195 = vld [vmem:[#allocation7 + $0xd0] sm:$0xff]
    %v196 = vld [vmem:[#allocation7 + $0xd8] sm:$0xff]
    %v197 = vld [vmem:[#allocation7 + $0xe0] sm:$0xff]
    %v198 = vld [vmem:[#allocation7 + $0xe8] sm:$0xff]
    %v199 = vld [vmem:[#allocation7 + $0xf0] sm:$0xff]
    %v200 = vld [vmem:[#allocation7 + $0xf8] sm:$0xff]
    %v201 = vld [vmem:[%s4] sm:$0x1]
    %v203 = vlaneseq
    %v204 = vshrl.u32 %v203, 7
    %v205 = vsub.s32 0, %v204
    %v206 = vrot.slane %v201, %v205
    %208 = vmatprep.subr.mxu0 0.0
    %209 = vmatpush1.msra.mxu0 %v184
    %210 = vmatprep.subr.mxu0 0.0
    %211 = vmatpush1.msra.mxu0 %v183
    %212 = vmatprep.subr.mxu0 0.0
    %213 = vmatpush1.msra.mxu0 %v182
    %214 = vmatprep.subr.mxu0 0.0
    %215 = vmatpush1.msra.mxu0 %v181
    %216 = vmatprep.subr.mxu0 0.0
    %217 = vmatpush1.msra.mxu0 %v180
    %218 = vmatprep.subr.mxu0 0.0
    %219 = vmatpush1.msra.mxu0 %v179
    %220 = vmatprep.subr.mxu0 0.0
    %221 = vmatpush1.msra.mxu0 %v178
    %222 = vmatprep.subr.mxu0 0.0
    %223 = vmatpush1.msra.mxu0 %v177
    %224 = vmatprep.subr.mxu0 0.0
    %225 = vmatpush1.msra.mxu0 %v176
    %226 = vmatprep.subr.mxu0 0.0
    %227 = vmatpush1.msra.mxu0 %v175
    %228 = vmatprep.subr.mxu0 0.0
    %229 = vmatpush1.msra.mxu0 %v174
    %230 = vmatprep.subr.mxu0 0.0
    %231 = vmatpush1.msra.mxu0 %v173
    %232 = vmatprep.subr.mxu0 0.0
    %233 = vmatpush1.msra.mxu0 %v172
    %234 = vmatprep.subr.mxu0 0.0
    %235 = vmatpush1.msra.mxu0 %v171
    %236 = vmatprep.subr.mxu0 0.0
    %237 = vmatpush1.msra.mxu0 %v170
    %238 = vmatprep.subr.mxu0 0.0
    %239 = vmatpush1.msra.mxu0 %v169
    %240 = vmatprep.subr.mxu0 0.0
    %241 = vmatpush2.msra.mxu0 %v200
    %242 = vmatprep.subr.mxu0 0.0
    %243 = vmatpush2.msra.mxu0 %v199
    %244 = vmatprep.subr.mxu0 0.0
    %245 = vmatpush2.msra.mxu0 %v198
    %246 = vmatprep.subr.mxu0 0.0
    %247 = vmatpush2.msra.mxu0 %v197
    %248 = vmatprep.subr.mxu0 0.0
    %249 = vmatpush2.msra.mxu0 %v196
    %250 = vmatprep.subr.mxu0 0.0
    %251 = vmatpush2.msra.mxu0 %v195
    %252 = vmatprep.subr.mxu0 0.0
    %253 = vmatpush2.msra.mxu0 %v194
    %254 = vmatprep.subr.mxu0 0.0
    %255 = vmatpush2.msra.mxu0 %v193
    %256 = vmatprep.subr.mxu0 0.0
    %257 = vmatpush2.msra.mxu0 %v192
    %258 = vmatprep.subr.mxu0 0.0
    %259 = vmatpush2.msra.mxu0 %v191
    %260 = vmatprep.subr.mxu0 0.0
    %261 = vmatpush2.msra.mxu0 %v190
    %262 = vmatprep.subr.mxu0 0.0
    %263 = vmatpush2.msra.mxu0 %v189
    %264 = vmatprep.subr.mxu0 0.0
    %265 = vmatpush2.msra.mxu0 %v188
    %266 = vmatprep.subr.mxu0 0.0
    %267 = vmatpush2.msra.mxu0 %v187
    %268 = vmatprep.subr.mxu0 0.0
    %269 = vmatpush2.msra.mxu0 %v186
    %270 = vmatprep.subr.mxu0 0.0
    %271 = vmatpush2.msra.mxu0 %v185
    %272 = vmatprep.mubr.f32.mxu0 %v168
    %273 = vmatmul.mubr.f32.gmra.mxu0 %v167
    %v274 = vpop.f32.mrf.mxu0
    %v275 = vadd.f32 %v206, %v274
    %v276 = vpop.f32.mrf.mxu0
    %277 = vdwg.mxu0
    %278 = vst [vmem:[%s5] sm:$0xff] %v275
    // Predicated region
    $region38: #{reg_deep_ensembles_forward.1} parent=1 // pred_check
      _
    $region39: #{reg_deep_ensembles_forward.1} parent=1 // pred_check_branch
      %280 = sbr.rel (0) target = $region41
    $region40: #{reg_deep_ensembles_forward.1} parent=1 // pred_region
      _
    $region41: #{reg_deep_ensembles_forward.1} parent=1 // pred_fallthru
      _
    // Predicated region
    $region42: #{reg_deep_ensembles_forward.1} parent=1 // pred_check
      _
    $region43: #{reg_deep_ensembles_forward.1} parent=1 // pred_check_branch
      %282 = sbr.rel (0) target = $region45
    $region44: #{reg_deep_ensembles_forward.1} parent=1 // pred_region
      _
    $region45: #{reg_deep_ensembles_forward.1} parent=1 // pred_fallthru
      _
    %283 = vsyncpa [#allocation3], 1
    %284 = vsyncpa [#allocation5], 1
    %285 = vsyncpa [#allocation8], 1

</llo_original>
